<compile_context>
chip_gen: v6e
topology: v6e:2x2x1
jax: 0.10.0
libtpu: 0.0.40
codegen_flags: <defaults>
</compile_context>

<pallas_src>
import functools

import jax
import jax.numpy as jnp
from jax.experimental import pallas as pl
from jax.experimental.pallas import tpu as pltpu

GAMMA = 1.5
ALPHA = 0.25
LANES = 128
# Lane-remainder padding: pred=+100, true=1 -> focal BCE loss underflows to
# exactly 0.0f, so padded elements never perturb the sum (no correction term).
_PAD_PRED = 100.0
_PAD_TRUE = 1.0


def _cdiv(a, b):
    return -(-a // b)


def _round_up(a, b):
    return _cdiv(a, b) * b


def _focal_kernel(pred_ref, true_ref, out_ref, acc_ref, *,
                  gamma, alpha, tile_rows, n_steps, rows_valid, any_partial):
    p = pl.program_id(0)      # parallel slice (one per TensorCore on v7x)
    s = pl.program_id(1)      # reduction step within the slice

    @pl.when(s == 0)
    def _():
        acc_ref[...] = jnp.zeros_like(acc_ref)

    x = pred_ref[...].astype(jnp.float32)
    t = true_ref[...].astype(jnp.float32)

    # One shared transcendental: e = exp(-|x|) feeds both the numerically
    # stable BCE-with-logits term and the sigmoid (via an approx EUP recip).
    e = jnp.exp(-jnp.abs(x))
    bce = jnp.maximum(x, 0.0) - x * t + jnp.log1p(e)

    inv = pl.reciprocal(1.0 + e, approx=True)        # EUP slot, ~free
    prob = jnp.where(x >= 0.0, inv, e * inv)         # sigmoid(x)

    # z = 1 - p_t, fused:  1 - (t*p + (1-t)*(1-p))  ==  p + t*(1 - 2p)
    z = prob + t * (1.0 - 2.0 * prob)
    # alpha_factor fused, constants folded at trace time:
    #   t*a + (1-t)*(1-a)  ==  (2a-1)*t + (1-a)
    alpha_factor = (2.0 * alpha - 1.0) * t + (1.0 - alpha)

    if gamma == 1.5:
        mod = z * jnp.sqrt(z)          # z**1.5 without exp/log
    elif gamma == 2.0:
        mod = z * z
    elif gamma == 1.0:
        mod = z
    else:
        mod = z ** gamma               # generic (exp/log) fallback

    loss = bce * alpha_factor * mod

    if any_partial:
        # Only tiles extending past the valid rows ever take the mask path;
        # the hot loop stays mask-free.
        row0 = (p * n_steps + s) * tile_rows
        needs_mask = row0 + tile_rows > rows_valid

        @pl.when(needs_mask)
        def _():
            r = jax.lax.broadcasted_iota(jnp.int32, loss.shape, 0) + row0
            acc_ref[...] += jnp.sum(jnp.where(r < rows_valid, loss, 0.0),
                                    axis=0, keepdims=True)

        @pl.when(jnp.logical_not(needs_mask))
        def _():
            acc_ref[...] += jnp.sum(loss, axis=0, keepdims=True)
    else:
        acc_ref[...] += jnp.sum(loss, axis=0, keepdims=True)

    @pl.when(s == pl.num_programs(1) - 1)
    def _():
        out_ref[...] = jnp.sum(acc_ref[...]).reshape(1, 1, 1)


def focal_loss(pred, true, *, gamma=GAMMA, alpha=ALPHA, reduction="mean",
               tile_rows=4096, num_parallel=2):
    """Focal BCE-with-logits loss.  pred/true: same-shape float arrays (NCHW)."""
    assert pred.shape == true.shape
    n_elem = pred.size
    assert n_elem > 0

    flat_pred = pred.reshape(-1)
    flat_true = true.reshape(-1)

    rem = n_elem % LANES
    if rem:
        # Rare path: <128 padded elements whose loss is exactly 0.
        pad = LANES - rem
        flat_pred = jnp.concatenate(
            [flat_pred, jnp.full((pad,), _PAD_PRED, flat_pred.dtype)])
        flat_true = jnp.concatenate(
            [flat_true, jnp.full((pad,), _PAD_TRUE, flat_true.dtype)])

    rows = flat_pred.size // LANES
    pred2d = flat_pred.reshape(rows, LANES)
    true2d = flat_true.reshape(rows, LANES)

    # ---- tiling ------------------------------------------------------------
    if rows <= tile_rows:
        tr = rows                        # full-extent block: always legal
    else:
        tr = _round_up(tile_rows, 8)
    total_blocks = _cdiv(rows, tr)

    # One slice per TensorCore on v7x; on single-TC chips it is small pure
    # overhead, so only enable it when each slice gets a few blocks.
    if num_parallel > 1 and total_blocks >= 2 * num_parallel:
        n_par = num_parallel
    else:
        n_par = 1
    n_steps = _cdiv(total_blocks, n_par)

    # The grid may over-cover total_blocks; clamp the block index so no DMA is
    # ever fully out of bounds.  Over-covered / partial tiles are removed by
    # the pl.when-gated row mask inside the kernel.
    any_partial = (n_par * n_steps * tr) > rows
    if n_par * n_steps > total_blocks:
        def in_map(p, s):
            return (jnp.minimum(p * n_steps + s, total_blocks - 1), 0)
    else:
        def in_map(p, s):
            return (p * n_steps + s, 0)

    kernel = functools.partial(
        _focal_kernel, gamma=gamma, alpha=alpha, tile_rows=tr,
        n_steps=n_steps, rows_valid=rows, any_partial=any_partial)

    partials = pl.pallas_call(
        kernel,
        out_shape=jax.ShapeDtypeStruct((n_par, 1, 1), jnp.float32),
        grid_spec=pltpu.PrefetchScalarGridSpec(
            num_scalar_prefetch=0,
            grid=(n_par, n_steps),
            in_specs=[
                pl.BlockSpec((tr, LANES), in_map),
                pl.BlockSpec((tr, LANES), in_map),
            ],
            out_specs=pl.BlockSpec((1, 1, 1), lambda p, s: (p, 0, 0)),
            scratch_shapes=[pltpu.VMEM((1, LANES), jnp.float32)],
        ),
        compiler_params=pltpu.CompilerParams(
            dimension_semantics=("parallel", "arbitrary"),
        ),
    )(pred2d, true2d)

    total = jnp.sum(partials)
    if reduction == "mean":   # BCEWithLogitsLoss default
        return total / jnp.float32(n_elem)
    elif reduction == "sum":
        return total
    # TODO(synk): reduction='none' would need a separate non-reducing
    # elementwise kernel; not implemented here.
    raise NotImplementedError("reduction='none' is not supported")


def _reference(pred, true, gamma=GAMMA, alpha=ALPHA):
    x = pred.astype(jnp.float32)
    t = true.astype(jnp.float32)
    bce = jnp.maximum(x, 0.0) - x * t + jnp.log1p(jnp.exp(-jnp.abs(x)))
    p = jax.nn.sigmoid(x)
    p_t = t * p + (1 - t) * (1 - p)
    af = t * alpha + (1 - t) * (1 - alpha)
    mf = (1.0 - p_t) ** gamma
    return jnp.mean(bce * af * mf)


if __name__ == "__main__":
    key = jax.random.PRNGKey(0)
    k1, k2 = jax.random.split(key)
    # NCHW: batch=2, channels=4, spatial=16x16 -> 2048 elements = 16 x 128
    pred = jax.random.normal(k1, (2, 4, 16, 16), dtype=jnp.float32)
    true = (jax.random.uniform(k2, (2, 4, 16, 16)) > 0.5).astype(jnp.float32)

    out = jax.block_until_ready(focal_loss(pred, true))
    ref = _reference(pred, true)
    # Tolerance loosened slightly: in-kernel sigmoid uses the approximate EUP
    # reciprocal (pl.reciprocal(approx=True)).
    assert jnp.allclose(out, ref, atol=2e-4, rtol=3e-3), (out, ref)
    print("KERNEL_OK")
</pallas_src>

<mosaic_0001>
module attributes {stable_mosaic.version = 11 : i64} {
  func.func @_focal_kernel(%arg0: i32, %arg1: i32, %arg2: memref<16x128xf32, #tpu.memory_space<vmem>>, %arg3: memref<16x128xf32, #tpu.memory_space<vmem>>, %arg4: memref<1x1x1xf32, #tpu.memory_space<vmem>>, %arg5: memref<1x128xf32, #tpu.memory_space<vmem>>) attributes {dimension_semantics = [#tpu.dimension_semantics<parallel>, #tpu.dimension_semantics<arbitrary>], iteration_bounds = array<i64: 1, 1>, scalar_prefetch = 0 : i64, scratch_operands = 1 : i64, tpu.core_type = #tpu.core_type<tc>, window_params = [{transform_indices = @transform_0, window_bounds = array<i64: 16, 128>}, {transform_indices = @transform_1, window_bounds = array<i64: 16, 128>}, {transform_indices = @transform_2, window_bounds = array<i64: 1, 1, 1>}]} {
    %c0_i32 = arith.constant 0 : i32
    %0 = arith.cmpi eq, %arg1, %c0_i32 : i32
    %1 = arith.extui %0 : i1 to i32
    %c0_i32_0 = arith.constant 0 : i32
    %2 = arith.cmpi ne, %1, %c0_i32_0 : i32
    scf.if %2 {
      %cst_18 = arith.constant 0.000000e+00 : f32
      %44 = vector.broadcast %cst_18 : f32 to vector<1x128xf32>
      %c0_19 = arith.constant 0 : index
      %c0_20 = arith.constant 0 : index
      %45 = vector.load %arg5[%c0_19, %c0_20] : memref<1x128xf32, #tpu.memory_space<vmem>>, vector<1x128xf32>
      tpu.vector_store %arg5[%c0_19, %c0_20], %44 {strides = array<i32>} : memref<1x128xf32, #tpu.memory_space<vmem>>, vector<1x128xf32>,
    } else {
    }
    %c0 = arith.constant 0 : index
    %c0_1 = arith.constant 0 : index
    %3 = vector.load %arg2[%c0, %c0_1] : memref<16x128xf32, #tpu.memory_space<vmem>>, vector<16x128xf32>
    %c0_2 = arith.constant 0 : index
    %c0_3 = arith.constant 0 : index
    %4 = vector.load %arg3[%c0_2, %c0_3] : memref<16x128xf32, #tpu.memory_space<vmem>>, vector<16x128xf32>
    %5 = math.absf %3 : vector<16x128xf32>
    %cst = arith.constant 0.000000e+00 : f32
    %6 = vector.broadcast %cst : f32 to vector<16x128xf32>
    %7 = arith.subf %6, %5 : vector<16x128xf32>
    %8 = math.exp %7 : vector<16x128xf32>
    %cst_4 = arith.constant 0.000000e+00 : f32
    %9 = vector.broadcast %cst_4 : f32 to vector<16x128xf32>
    %10 = arith.maximumf %3, %9 : vector<16x128xf32>
    %11 = arith.mulf %3, %4 : vector<16x128xf32>
    %12 = arith.subf %10, %11 : vector<16x128xf32>
    %13 = math.log1p %8 : vector<16x128xf32>
    %14 = arith.addf %12, %13 : vector<16x128xf32>
    %cst_5 = arith.constant 1.000000e+00 : f32
    %15 = vector.broadcast %cst_5 : f32 to vector<16x128xf32>
    %16 = arith.addf %15, %8 : vector<16x128xf32>
    %17 = tpu.reciprocal %16 {approx = true} : vector<16x128xf32> -> vector<16x128xf32>
    %cst_6 = arith.constant 0.000000e+00 : f32
    %18 = vector.broadcast %cst_6 : f32 to vector<16x128xf32>
    %19 = arith.cmpf oge, %3, %18 : vector<16x128xf32>
    %20 = arith.mulf %8, %17 : vector<16x128xf32>
    %21 = arith.select %19, %17, %20 : vector<16x128xi1>, vector<16x128xf32>
    %cst_7 = arith.constant 2.000000e+00 : f32
    %22 = vector.broadcast %cst_7 : f32 to vector<16x128xf32>
    %23 = arith.mulf %22, %21 : vector<16x128xf32>
    %cst_8 = arith.constant 1.000000e+00 : f32
    %24 = vector.broadcast %cst_8 : f32 to vector<16x128xf32>
    %25 = arith.subf %24, %23 : vector<16x128xf32>
    %26 = arith.mulf %4, %25 : vector<16x128xf32>
    %27 = arith.addf %21, %26 : vector<16x128xf32>
    %cst_9 = arith.constant -5.000000e-01 : f32
    %28 = vector.broadcast %cst_9 : f32 to vector<16x128xf32>
    %29 = arith.mulf %28, %4 : vector<16x128xf32>
    %cst_10 = arith.constant 7.500000e-01 : f32
    %30 = vector.broadcast %cst_10 : f32 to vector<16x128xf32>
    %31 = arith.addf %29, %30 : vector<16x128xf32>
    %32 = math.sqrt %27 : vector<16x128xf32>
    %33 = arith.mulf %27, %32 : vector<16x128xf32>
    %34 = arith.mulf %14, %31 : vector<16x128xf32>
    %35 = arith.mulf %34, %33 : vector<16x128xf32>
    %c0_11 = arith.constant 0 : index
    %c0_12 = arith.constant 0 : index
    %36 = vector.load %arg5[%c0_11, %c0_12] : memref<1x128xf32, #tpu.memory_space<vmem>>, vector<1x128xf32>
    %cst_13 = arith.constant dense<0.000000e+00> : vector<128xf32>
    %37 = vector.multi_reduction <add>, %35, %cst_13 [0] : vector<16x128xf32> to vector<128xf32>
    %38 = vector.shape_cast %37 : vector<128xf32> to vector<1x128xf32>
    %39 = arith.addf %36, %38 : vector<1x128xf32>
    %c0_14 = arith.constant 0 : index
    %c0_15 = arith.constant 0 : index
    %40 = vector.load %arg5[%c0_14, %c0_15] : memref<1x128xf32, #tpu.memory_space<vmem>>, vector<1x128xf32>
    tpu.vector_store %arg5[%c0_14, %c0_15], %39 {strides = array<i32>} : memref<1x128xf32, #tpu.memory_space<vmem>>, vector<1x128xf32>,
    %c0_i32_16 = arith.constant 0 : i32
    %41 = arith.cmpi eq, %arg1, %c0_i32_16 : i32
    %42 = arith.extui %41 : i1 to i32
    %c0_i32_17 = arith.constant 0 : i32
    %43 = arith.cmpi ne, %42, %c0_i32_17 : i32
    scf.if %43 {
      %c0_18 = arith.constant 0 : index
      %c0_19 = arith.constant 0 : index
      %44 = vector.load %arg5[%c0_18, %c0_19] : memref<1x128xf32, #tpu.memory_space<vmem>>, vector<1x128xf32>
      %45 = vector.shape_cast %44 : vector<1x128xf32> to vector<1x1x128xf32>
      %cst_20 = arith.constant dense<0.000000e+00> : vector<1xf32>
      %46 = vector.multi_reduction <add>, %45, %cst_20 [1, 2] : vector<1x1x128xf32> to vector<1xf32>
      %47 = vector.shape_cast %46 : vector<1xf32> to vector<1x1x1xf32>
      %48 = vector.extract %47[0, 0, 0] : f32 from vector<1x1x1xf32>
      %49 = vector.broadcast %48 : f32 to vector<1x1x1xf32>
      %c0_21 = arith.constant 0 : index
      %c0_22 = arith.constant 0 : index
      %c0_23 = arith.constant 0 : index
      %50 = vector.load %arg4[%c0_21, %c0_22, %c0_23] : memref<1x1x1xf32, #tpu.memory_space<vmem>>, vector<1x1x1xf32>
      tpu.vector_store %arg4[%c0_21, %c0_22, %c0_23], %49 {strides = array<i32>} : memref<1x1x1xf32, #tpu.memory_space<vmem>>, vector<1x1x1xf32>,
    } else {
    }
    return
  }
  func.func @transform_0(%arg0: i32, %arg1: i32) -> (i32, i32) {
    %c1_i32 = arith.constant 1 : i32
    %0 = arith.muli %arg0, %c1_i32 : i32
    %1 = arith.addi %0, %arg1 : i32
    %c0_i32 = arith.constant 0 : i32
    %c0_i32_0 = arith.constant 0 : i32
    return %1, %c0_i32 : i32, i32
  }
  func.func @transform_1(%arg0: i32, %arg1: i32) -> (i32, i32) {
    %c1_i32 = arith.constant 1 : i32
    %0 = arith.muli %arg0, %c1_i32 : i32
    %1 = arith.addi %0, %arg1 : i32
    %c0_i32 = arith.constant 0 : i32
    %c0_i32_0 = arith.constant 0 : i32
    return %1, %c0_i32 : i32, i32
  }
  func.func @transform_2(%arg0: i32, %arg1: i32) -> (i32, i32, i32) {
    %c0_i32 = arith.constant 0 : i32
    %c0_i32_0 = arith.constant 0 : i32
    %c0_i32_1 = arith.constant 0 : i32
    return %arg0, %c0_i32, %c0_i32_0 : i32, i32, i32
  }
}

</mosaic_0001>

<llo_original>
// kernel: tpu_custom_call.1
$region0: #{tpu_custom_call.1}
  #allocation0 [shape = 'u32[]', space=smem, size = 0x4, offset = 0x4, fixed_abs, tag = 'smem constant byte address 0x4 - core index']
  #allocation1 [shape = 'u32[144,128]{1,0:T(1,128)}', space=vmem, size = 0x12000, scoped, tag = 'internal scratch']
  #allocation2 [shape = 'f32[1,128]{1,0:T(1,128)}', space=vmem, size = 0x200, scoped, tag = 'scratch operand']
  %s0 = inlined_call_operand.hbm [shape: f32[16,128], index: 0, kind: input, shape index: {}]
  %s1 = inlined_call_operand.hbm [shape: f32[16,128], index: 1, kind: input, shape index: {}]
  %s2 = inlined_call_operand.hbm [shape: f32[1,1,1], index: 2, kind: output, shape index: {}]
  %s3 = sld [smem:[#allocation0]]
  $region34: #{tpu_custom_call.1} parent=0
    _
  %s5 = ssub.s32 1, %s3
  %s6 = scalar_select 0, %s5, %s3
  $region1: #{tpu_custom_call.1} parent=0
    #allocation3 [shape = 'u8[8192]{0}', space=vmem, size = 0x2000, scoped, tag = 'input window, operand 0, single buffered']
    #allocation4 [shape = 's32[1]{0}', space=sflag, size = 0x4, scoped, tag = 'scoped memory for tpu_custom_call.1']
    #allocation5 [shape = 's32[1]{0}', space=sflag, size = 0x4, scoped, tag = 'scoped memory for tpu_custom_call.1']
    #allocation6 [shape = 'u8[8192]{0}', space=vmem, size = 0x2000, scoped, tag = 'input window, operand 1, single buffered']
    #allocation7 [shape = 's32[1]{0}', space=sflag, size = 0x4, scoped, tag = 'scoped memory for tpu_custom_call.1']
    #allocation8 [shape = 'u8[512]{0}', space=vmem, size = 0x400, scoped, tag = 'output window, operand 0, single buffered']
    %7 = vsyncpa [#allocation4], 0
    %8 = vsyncpa [#allocation7], 0
    %9 = vsyncpa [#allocation5], 0
    // Predicated region
    $region2: #{tpu_custom_call.1} parent=1 // pred_check
      _
    $region3: #{tpu_custom_call.1} parent=1 // pred_check_branch
      %11 = sbr.rel (0) target = $region5
    $region4: #{tpu_custom_call.1} parent=1 // pred_region
      %s12 = sadd.s32 0, 0
      %s13 = smul.u32 2, %s12
      %s15 = ssub.s32 256, 256
      %16 = vsyncadd [#allocation4], %s15
      %s17 = smul.addr %s13, 128
      %s18 = scalar_lea.hbm %s0, %s17
      %s19 = sshll.u32 [#allocation3], 4
      %s20 = int_to_ptr.vmem [resolvable:$true] %s19
      %25 = dma.hbm_to_vmem [thread:$0]  %s18, 256, %s20, [#allocation4], 128, 128, 8
    $region5: #{tpu_custom_call.1} parent=1 // pred_fallthru
      _
    // Predicated region
    $region6: #{tpu_custom_call.1} parent=1 // pred_check
      _
    $region7: #{tpu_custom_call.1} parent=1 // pred_check_branch
      %27 = sbr.rel (0) target = $region9
    $region8: #{tpu_custom_call.1} parent=1 // pred_region
      %s28 = sadd.s32 0, 0
      %s29 = smul.u32 2, %s28
      %s31 = ssub.s32 256, 256
      %32 = vsyncadd [#allocation7], %s31
      %s33 = smul.addr %s29, 128
      %s34 = scalar_lea.hbm %s1, %s33
      %s35 = sshll.u32 [#allocation6], 4
      %s36 = int_to_ptr.vmem [resolvable:$true] %s35
      %41 = dma.hbm_to_vmem [thread:$0]  %s34, 256, %s36, [#allocation7], 128, 128, 8
    $region9: #{tpu_custom_call.1} parent=1 // pred_fallthru
      _
    // Predicated region
    $region10: #{tpu_custom_call.1} parent=1 // pred_check
      _
    $region11: #{tpu_custom_call.1} parent=1 // pred_check_branch
      %43 = sbr.rel (0) target = $region13
    $region12: #{tpu_custom_call.1} parent=1 // pred_region
      %44 = dma.done [#allocation4], 256
    $region13: #{tpu_custom_call.1} parent=1 // pred_fallthru
      _
    // Predicated region
    $region14: #{tpu_custom_call.1} parent=1 // pred_check
      _
    $region15: #{tpu_custom_call.1} parent=1 // pred_check_branch
      %46 = sbr.rel (0) target = $region17
    $region16: #{tpu_custom_call.1} parent=1 // pred_region
      %47 = dma.done [#allocation7], 256
    $region17: #{tpu_custom_call.1} parent=1 // pred_fallthru
      _
    %s48 = sadd.s32 0, 0
    %s49 = smul.u32 2, %s48
    %s50 = sadd.s32 0, 0
    %s51 = smul.u32 2, %s50
    %p52 = scmp.eq.s32.totalorder 0, 0
    // Predicated region
    $region18: #{tpu_custom_call.1} parent=1 // pred_check
      %p53 = pneg %p52
    $region19: #{tpu_custom_call.1} parent=1 // pred_check_branch
      %55 = sbr.rel (%p53) target = $region21
    $region20: #{tpu_custom_call.1} parent=1 // pred_region
      %56 = vst [vmem:[#allocation2] sm:$0x1] 0.0
    $region21: #{tpu_custom_call.1} parent=1 // pred_fallthru
      _
    %v57 = vld [vmem:[#allocation3] sm:$0xff]
    %v58 = vld [vmem:[#allocation3 + $0x8] sm:$0xff]
    %v59 = vld [vmem:[#allocation6] sm:$0xff]
    %v60 = vld [vmem:[#allocation6 + $0x8] sm:$0xff]
    %v61 = vand.u32 2147483647, %v57
    %v62 = vand.u32 2147483647, %v58
    %v63 = vsub.f32 0.0, %v61
    %v64 = vsub.f32 0.0, %v62
    %v65 = vmul.f32 %v63, 1.442695
    %v66 = vpow.pop %v65
    %v67 = vmul.f32 %v64, 1.442695
    %v68 = vpow.pop %v67
    %v69 = vmax.f32 %v57, 0.0
    %v70 = vmax.f32 %v58, 0.0
    %v71 = vmul.f32 %v57, %v59
    %v72 = vmul.f32 %v58, %v60
    %v73 = vsub.f32 %v69, %v71
    %v74 = vsub.f32 %v70, %v72
    %v75 = vadd.f32 %v66, 1.0
    %v76 = vlog2.pop %v75
    %v77 = vmul.f32 %v76, 0.6931472
    %v78 = vmul.f32 -0.5, %v66
    %v79 = vadd.f32 %v78, 1.0
    %v80 = vmul.f32 %v79, %v66
    %v81 = vand.u32 2147483647, %v66
    %vm82 = vcmp.lt.f32.partialorder %v81, 0.0004427343
    %v83 = vsel %vm82, %v80, %v77
    %v84 = vadd.f32 %v68, 1.0
    %v85 = vlog2.pop %v84
    %v86 = vmul.f32 %v85, 0.6931472
    %v87 = vmul.f32 -0.5, %v68
    %v88 = vadd.f32 %v87, 1.0
    %v89 = vmul.f32 %v88, %v68
    %v90 = vand.u32 2147483647, %v68
    %vm91 = vcmp.lt.f32.partialorder %v90, 0.0004427343
    %v92 = vsel %vm91, %v89, %v86
    %v93 = vadd.f32 %v73, %v83
    %v94 = vadd.f32 %v74, %v92
    %v95 = vadd.f32 %v66, 1.0
    %v96 = vadd.f32 %v68, 1.0
    %v97 = vrcp.pop %v95
    %v98 = vrcp.pop %v96
    %vm99 = vcmp.ge.f32.partialorder %v57, 0.0
    %vm100 = vcmp.ge.f32.partialorder %v58, 0.0
    %v101 = vmul.f32 %v66, %v97
    %v102 = vmul.f32 %v68, %v98
    %v103 = vsel %vm99, %v97, %v101
    %v104 = vsel %vm100, %v98, %v102
    %v105 = vmul.f32 %v103, 2.0
    %v106 = vmul.f32 %v104, 2.0
    %v107 = vsub.f32 1.0, %v105
    %v108 = vsub.f32 1.0, %v106
    %v109 = vmul.f32 %v59, %v107
    %v110 = vmul.f32 %v60, %v108
    %v111 = vadd.f32 %v103, %v109
    %v112 = vadd.f32 %v104, %v110
    %v113 = vmul.f32 %v59, -0.5
    %v114 = vmul.f32 %v60, -0.5
    %v115 = vadd.f32 %v113, 0.75
    %v116 = vadd.f32 %v114, 0.75
    %v117 = vrsqrt.pop %v111
    %v118 = vmul.f32 %v111, %v117
    %vm119 = vcmp.eq.f32.partialorder %v111, inf
    %v120 = vsel %vm119, %v111, %v118
    %vm121 = vcmp.eq.f32.partialorder %v111, 0.0
    %v122 = vand.u32 %v111, 2147483648
    %v123 = vsel %vm121, %v122, %v120
    %v124 = vrsqrt.pop %v112
    %v125 = vmul.f32 %v112, %v124
    %vm126 = vcmp.eq.f32.partialorder %v112, inf
    %v127 = vsel %vm126, %v112, %v125
    %vm128 = vcmp.eq.f32.partialorder %v112, 0.0
    %v129 = vand.u32 %v112, 2147483648
    %v130 = vsel %vm128, %v129, %v127
    %v131 = vmul.f32 %v111, %v123
    %v132 = vmul.f32 %v112, %v130
    %v133 = vmul.f32 %v93, %v115
    %v134 = vmul.f32 %v94, %v116
    %v135 = vmul.f32 %v133, %v131
    %v136 = vmul.f32 %v134, %v132
    %v137 = vld [vmem:[#allocation2] sm:$0x1]
    %v138 = vadd.f32 %v135, %v136
    %v139 = vrot.slane %v138, 4
    %v140 = vadd.f32 %v138, %v139
    %v141 = vrot.slane %v140, 2
    %v142 = vadd.f32 %v140, %v141
    %v143 = vrot.slane %v142, 1
    %v144 = vadd.f32 %v142, %v143
    %v145 = vadd.f32 %v137, %v144
    %146 = vst [vmem:[#allocation2] sm:$0x1] %v145
    // Predicated region
    $region22: #{tpu_custom_call.1} parent=1 // pred_check
      %p147 = pneg %p52
    $region23: #{tpu_custom_call.1} parent=1 // pred_check_branch
      %149 = sbr.rel (%p147) target = $region25
    $region24: #{tpu_custom_call.1} parent=1 // pred_region
      %v150 = vld [vmem:[#allocation2] sm:$0x1]
      %vm151 = vcmask 1040384
      %v152 = vsel %vm151, %v150, 0.0
      %153 = vadd.xlane.f32.xlu0 %v152
      %v154 = vpop.xlane.xlu0 %153
      %v155 = vrot.slane %v154, 4
      %v156 = vadd.f32 %v154, %v155
      %v157 = vrot.slane %v156, 2
      %v158 = vadd.f32 %v156, %v157
      %v159 = vrot.slane %v158, 1
      %v160 = vadd.f32 %v158, %v159
      %s161 = vtos %v160
      %v162 = vstv %s161
      %vm163 = vcmask 0
      %164 = vst.msk [vmem:[#allocation8] sm:$0x1] %vm163, %v162
    $region25: #{tpu_custom_call.1} parent=1 // pred_fallthru
      _
    // Predicated region
    $region26: #{tpu_custom_call.1} parent=1 // pred_check
      _
    $region27: #{tpu_custom_call.1} parent=1 // pred_check_branch
      %166 = sbr.rel (0) target = $region29
    $region28: #{tpu_custom_call.1} parent=1 // pred_region
      %s168 = ssub.s32 16, 16
      %169 = vsyncadd [#allocation5], %s168
      %s171 = sshll.u32 [#allocation8], 4
      %s172 = int_to_ptr.vmem [resolvable:$true] %s171
      %174 = dma.vmem_to_hbm [thread:$0]  %s172, 16, %s2, [#allocation5]
    $region29: #{tpu_custom_call.1} parent=1 // pred_fallthru
      _
    // Predicated region
    $region30: #{tpu_custom_call.1} parent=1 // pred_check
      _
    $region31: #{tpu_custom_call.1} parent=1 // pred_check_branch
      %176 = sbr.rel (0) target = $region33
    $region32: #{tpu_custom_call.1} parent=1 // pred_region
      %177 = dma.done [#allocation5], 16
    $region33: #{tpu_custom_call.1} parent=1 // pred_fallthru
      _
    %178 = vsyncpa [#allocation4], 1
    %179 = vsyncpa [#allocation7], 1
    %180 = vsyncpa [#allocation5], 1

</llo_original>
